<compile_context>
chip_gen: v6e
topology: v6e:2x2x1
jax: 0.10.0
libtpu: 0.0.40
codegen_flags: <defaults>
</compile_context>

<pallas_src>
import functools

import jax
import jax.numpy as jnp
from jax.experimental import pallas as pl
from jax.experimental.pallas import tpu as pltpu

_LANE = 128     # vreg lane width
_SUBLANE = 8    # f32 sublane count


def _round_up(n, m):
    return ((n + m - 1) // m) * m


def _make_fused_mlp_kernel(layer_shape):
    """Build the fused-MLP kernel for a static layer_shape.

    Kernel args: (x_ref, w_ref, b_ref, o_ref)
      x_ref: (B, layer_shape[0])              -- unpadded input
      w_ref: (L, in_max, out_max)             -- packed, pre-transposed (in, out)
      b_ref: (L, 1, out_max)                  -- packed biases
      o_ref: (B, layer_shape[-1])             -- unpadded output
    The layer loop is unrolled at trace time; activations never leave VMEM.
    """
    dims = tuple(int(d) for d in layer_shape)

    def kernel(x_ref, w_ref, b_ref, o_ref):
        h = x_ref[...].astype(jnp.float32)
        for m in range(len(dims) - 1):
            in_m, out_m = dims[m], dims[m + 1]
            w = w_ref[m, :in_m, :out_m]     # static slice of the packed slab
            b = b_ref[m, :, :out_m]         # (1, out_m)
            # MXU matmul, f32 accumulation; bias + tanh in f32.
            # TODO(synk): once feature dims grow past toy size, cast h and w to
            # bf16 here (keep preferred_element_type=f32 and keep bias+tanh in
            # f32, esp. on v5e which has no bf16 VPU/EUP) for ~3x MXU
            # throughput on v6e/v7x and half the weight DMA bytes.
            y = jnp.dot(h, w, preferred_element_type=jnp.float32) + b
            h = jnp.tanh(y)
        o_ref[...] = h.astype(o_ref.dtype)

    return kernel


def prepare_fused_params(params):
    """One-time prep (amortized): transpose each PyTorch-style (out, in) weight
    to (in, out) and pack all layers into a single zero-padded slab each:
      w_packed: (L, in_max, out_max)   b_packed: (L, 1, out_max)
    Zero padding is never read by the kernel (it slices to true dims), so it is
    exact by construction."""
    n_layers = len(params)
    in_dims = [w.shape[1] for w, _ in params]
    out_dims = [w.shape[0] for w, _ in params]
    in_max = _round_up(max(in_dims), _SUBLANE)
    out_max = _round_up(max(out_dims), _LANE)

    w_packed = jnp.zeros((n_layers, in_max, out_max), jnp.float32)
    b_packed = jnp.zeros((n_layers, 1, out_max), jnp.float32)
    for m, (w, b) in enumerate(params):
        o, i = w.shape
        w_packed = w_packed.at[m, :i, :o].set(w.T.astype(jnp.float32))
        b_packed = b_packed.at[m, 0, :o].set(b.astype(jnp.float32))
    return w_packed, b_packed


@functools.partial(jax.jit, static_argnames=("layer_shape",))
def net_forward(x, w_packed, b_packed, layer_shape):
    """Net.forward: x = tanh(Linear_m(x)) for all layers, in ONE Pallas call."""
    B = x.shape[0]
    out_dim = int(layer_shape[-1])
    n_layers = len(layer_shape) - 1

    flops = sum(2 * B * layer_shape[m] * layer_shape[m + 1] for m in range(n_layers))
    transcendentals = sum(B * layer_shape[m + 1] for m in range(n_layers))
    bytes_accessed = (x.size * x.dtype.itemsize
                      + w_packed.size * w_packed.dtype.itemsize
                      + b_packed.size * b_packed.dtype.itemsize
                      + B * out_dim * x.dtype.itemsize)

    kernel = _make_fused_mlp_kernel(layer_shape)
    vmem_spec = pl.BlockSpec(memory_space=pltpu.MemorySpace.VMEM)

    # No grid: the whole working set is a few tens of KB and VMEM-resident, so
    # we skip the pipeline machinery and per-grid-step overhead entirely.
    # TODO(synk): if batch grows large, grid over batch blocks with
    # dimension_semantics=("parallel",) (shards across v7x's 2 TensorCores),
    # weight/bias index_maps returning the same block every step (weights stay
    # VMEM-resident), batch tiles >=128 (v5e) / >=256 (v6e/v7x) rows, and tile
    # sizes re-derived against v7x's 64 MiB VMEM (set vmem_limit_bytes).
    return pl.pallas_call(
        kernel,
        out_shape=jax.ShapeDtypeStruct((B, out_dim), x.dtype),
        in_specs=[vmem_spec, vmem_spec, vmem_spec],
        out_specs=vmem_spec,
        cost_estimate=pl.CostEstimate(
            flops=flops,
            transcendentals=transcendentals,
            bytes_accessed=bytes_accessed,
        ),
    )(x, w_packed, b_packed)


def init_net_params(key, layer_shape):
    """Deterministic PyTorch-nn.Linear-style init: U(-1/sqrt(fan_in), 1/sqrt(fan_in))."""
    params = []
    for m in range(len(layer_shape) - 1):
        fan_in, fan_out = layer_shape[m], layer_shape[m + 1]
        key, kw, kb = jax.random.split(key, 3)
        bound = 1.0 / jnp.sqrt(jnp.float32(fan_in))
        w = jax.random.uniform(kw, (fan_out, fan_in), jnp.float32, -bound, bound)
        b = jax.random.uniform(kb, (fan_out,), jnp.float32, -bound, bound)
        params.append((w, b))
    return params


if __name__ == "__main__":
    key = jax.random.PRNGKey(0)
    layer_shape = (32, 64, 16)   # Net(layer_shape=[32, 64, 16])
    batch = 8

    kx, kp = jax.random.split(key)
    x = jax.random.normal(kx, (batch, layer_shape[0]), jnp.float32)
    params = init_net_params(kp, layer_shape)
    w_packed, b_packed = prepare_fused_params(params)   # one-time, amortized

    out = net_forward(x, w_packed, b_packed, layer_shape)
    out = jax.block_until_ready(out)

    # Pure-JAX reference (same math, no Pallas) to validate semantics.
    ref = x
    for w, b in params:
        ref = jnp.tanh(ref @ w.T + b)
    assert out.shape == (batch, layer_shape[-1])
    assert jnp.allclose(out, ref, atol=1e-5, rtol=1e-5), "mismatch vs reference"

    print("KERNEL_OK")
</pallas_src>

<mosaic_0001>
module attributes {stable_mosaic.version = 11 : i64} {
  func.func @kernel(%arg0: memref<8x32xf32, #tpu.memory_space<vmem>>, %arg1: memref<2x64x128xf32, #tpu.memory_space<vmem>>, %arg2: memref<2x1x128xf32, #tpu.memory_space<vmem>>, %arg3: memref<8x16xf32, #tpu.memory_space<vmem>>) attributes {dimension_semantics = [], scalar_prefetch = 0 : i64, scratch_operands = 0 : i64, tpu.core_type = #tpu.core_type<tc>} {
    %c0 = arith.constant 0 : index
    %c0_0 = arith.constant 0 : index
    %0 = vector.load %arg0[%c0, %c0_0] : memref<8x32xf32, #tpu.memory_space<vmem>>, vector<8x32xf32>
    %c0_1 = arith.constant 0 : index
    %c0_2 = arith.constant 0 : index
    %c0_3 = arith.constant 0 : index
    %1 = vector.load %arg1[%c0_1, %c0_2, %c0_3] : memref<2x64x128xf32, #tpu.memory_space<vmem>>, vector<1x32x64xf32>
    %2 = vector.shape_cast %1 : vector<1x32x64xf32> to vector<32x64xf32>
    %c0_4 = arith.constant 0 : index
    %c0_5 = arith.constant 0 : index
    %c0_6 = arith.constant 0 : index
    %3 = vector.load %arg2[%c0_4, %c0_5, %c0_6] : memref<2x1x128xf32, #tpu.memory_space<vmem>>, vector<1x1x64xf32>
    %4 = vector.shape_cast %3 : vector<1x1x64xf32> to vector<1x64xf32>
    %cst = arith.constant dense<0.000000e+00> : vector<8x64xf32>
    %5 = tpu.matmul %0, %2, %cst {dimension_numbers = #tpu.dot_dimension_numbers<[1], [0], [0], [1], [0, 0, 1, 1], [], []>} : vector<8x32xf32>, vector<32x64xf32>, vector<8x64xf32> -> vector<8x64xf32>
    %6 = vector.broadcast %4 : vector<1x64xf32> to vector<8x64xf32>
    %7 = arith.addf %5, %6 : vector<8x64xf32>
    %8 = math.tanh %7 : vector<8x64xf32>
    %c1 = arith.constant 1 : index
    %c0_7 = arith.constant 0 : index
    %c0_8 = arith.constant 0 : index
    %9 = vector.load %arg1[%c1, %c0_7, %c0_8] : memref<2x64x128xf32, #tpu.memory_space<vmem>>, vector<1x64x16xf32>
    %10 = vector.shape_cast %9 : vector<1x64x16xf32> to vector<64x16xf32>
    %c1_9 = arith.constant 1 : index
    %c0_10 = arith.constant 0 : index
    %c0_11 = arith.constant 0 : index
    %11 = vector.load %arg2[%c1_9, %c0_10, %c0_11] : memref<2x1x128xf32, #tpu.memory_space<vmem>>, vector<1x1x16xf32>
    %12 = vector.shape_cast %11 : vector<1x1x16xf32> to vector<1x16xf32>
    %cst_12 = arith.constant dense<0.000000e+00> : vector<8x16xf32>
    %13 = tpu.matmul %8, %10, %cst_12 {dimension_numbers = #tpu.dot_dimension_numbers<[1], [0], [0], [1], [0, 0, 1, 1], [], []>} : vector<8x64xf32>, vector<64x16xf32>, vector<8x16xf32> -> vector<8x16xf32>
    %14 = vector.broadcast %12 : vector<1x16xf32> to vector<8x16xf32>
    %15 = arith.addf %13, %14 : vector<8x16xf32>
    %16 = math.tanh %15 : vector<8x16xf32>
    %c0_13 = arith.constant 0 : index
    %c0_14 = arith.constant 0 : index
    %17 = vector.load %arg3[%c0_13, %c0_14] : memref<8x16xf32, #tpu.memory_space<vmem>>, vector<8x16xf32>
    tpu.vector_store %arg3[%c0_13, %c0_14], %16 {strides = array<i32>} : memref<8x16xf32, #tpu.memory_space<vmem>>, vector<8x16xf32>,
    return
  }
}

</mosaic_0001>

<llo_original>
// kernel: net_forward.1
$region0: #{net_forward.1}
  #allocation0 [shape = 'u32[]', space=smem, size = 0x4, offset = 0x4, fixed_abs, tag = 'smem constant byte address 0x4 - core index']
  #allocation1 [shape = 'u32[144,128]{1,0:T(1,128)}', space=vmem, size = 0x12000, scoped, tag = 'internal scratch']
  %s0 = inlined_call_operand.hbm [shape: f32[8,32], index: 0, kind: input, shape index: {}]
  %s1 = inlined_call_operand.hbm [shape: f32[2,64,128], index: 1, kind: input, shape index: {}]
  %s2 = inlined_call_operand.vmem [shape: f32[2,1,128], index: 2, kind: input, shape index: {}]
  %s3 = inlined_call_operand.hbm [shape: f32[8,16], index: 3, kind: output, shape index: {}]
  %s4 = sld [smem:[#allocation0]]
  $region30: #{net_forward.1} parent=0
    _
  %s6 = ssub.s32 1, %s4
  %s7 = scalar_select 0, %s6, %s4
  $region1: #{net_forward.1} parent=0
    #allocation2 [shape = 'u8[4096]{0}', space=vmem, size = 0x1000, scoped, tag = 'input window, operand 0, single buffered']
    #allocation3 [shape = 's32[1]{0}', space=sflag, size = 0x4, scoped, tag = 'scoped memory for net_forward.1']
    #allocation4 [shape = 's32[1]{0}', space=sflag, size = 0x4, scoped, tag = 'scoped memory for net_forward.1']
    #allocation5 [shape = 'u8[65536]{0}', space=vmem, size = 0x10000, scoped, tag = 'input window, operand 1, single buffered']
    #allocation6 [shape = 's32[1]{0}', space=sflag, size = 0x4, scoped, tag = 'scoped memory for net_forward.1']
    #allocation7 [shape = 'u8[4096]{0}', space=vmem, size = 0x1000, scoped, tag = 'output window, operand 0, single buffered']
    %8 = vsyncpa [#allocation3], 0
    %9 = vsyncpa [#allocation6], 0
    %10 = vsyncpa [#allocation4], 0
    // Predicated region
    $region2: #{net_forward.1} parent=1 // pred_check
      _
    $region3: #{net_forward.1} parent=1 // pred_check_branch
      %12 = sbr.rel (0) target = $region5
    $region4: #{net_forward.1} parent=1 // pred_region
      %s14 = ssub.s32 128, 128
      %15 = vsyncadd [#allocation3], %s14
      %s17 = sshll.u32 [#allocation2], 4
      %s18 = int_to_ptr.vmem [resolvable:$true] %s17
      %20 = dma.hbm_to_vmem [thread:$0]  %s0, 128, %s18, [#allocation3]
    $region5: #{net_forward.1} parent=1 // pred_fallthru
      _
    // Predicated region
    $region6: #{net_forward.1} parent=1 // pred_check
      _
    $region7: #{net_forward.1} parent=1 // pred_check_branch
      %22 = sbr.rel (0) target = $region9
    $region8: #{net_forward.1} parent=1 // pred_region
      %s24 = ssub.s32 2048, 2048
      %25 = vsyncadd [#allocation6], %s24
      %s26 = sshll.u32 [#allocation5], 4
      %s27 = int_to_ptr.vmem [resolvable:$true] %s26
      %32 = dma.hbm_to_vmem [thread:$0]  %s1, 2048, %s27, [#allocation6], 128, 128, 8
    $region9: #{net_forward.1} parent=1 // pred_fallthru
      _
    // Predicated region
    $region10: #{net_forward.1} parent=1 // pred_check
      _
    $region11: #{net_forward.1} parent=1 // pred_check_branch
      %34 = sbr.rel (0) target = $region13
    $region12: #{net_forward.1} parent=1 // pred_region
      _
    $region13: #{net_forward.1} parent=1 // pred_fallthru
      _
    // Predicated region
    $region14: #{net_forward.1} parent=1 // pred_check
      _
    $region15: #{net_forward.1} parent=1 // pred_check_branch
      %36 = sbr.rel (0) target = $region17
    $region16: #{net_forward.1} parent=1 // pred_region
      %37 = dma.done [#allocation3], 128
    $region17: #{net_forward.1} parent=1 // pred_fallthru
      _
    // Predicated region
    $region18: #{net_forward.1} parent=1 // pred_check
      _
    $region19: #{net_forward.1} parent=1 // pred_check_branch
      %39 = sbr.rel (0) target = $region21
    $region20: #{net_forward.1} parent=1 // pred_region
      %40 = dma.done [#allocation6], 2048
    $region21: #{net_forward.1} parent=1 // pred_fallthru
      _
    %v41 = vld [vmem:[#allocation2] sm:$0xff]
    %v42 = vld [vmem:[#allocation5] sm:$0xff]
    %v43 = vld [vmem:[#allocation5 + $0x8] sm:$0xff]
    %v44 = vld [vmem:[#allocation5 + $0x10] sm:$0xff]
    %v45 = vld [vmem:[#allocation5 + $0x18] sm:$0xff]
    %v46 = vld [vmem:[%s2] sm:$0x1]
    %v48 = vlaneseq
    %v49 = vshrl.u32 %v48, 7
    %v50 = vsub.s32 0, %v49
    %v51 = vrot.slane %v46, %v50
    %vm53 = vcmask 261120
    %v55 = vsel %vm53, %v41, 0
    %57 = vmatprep.subr.mxu0 0.0
    %58 = vmatpush1.msra.mxu0 0.0
    %59 = vmatprep.subr.mxu0 0.0
    %60 = vmatpush1.msra.mxu0 0.0
    %61 = vmatprep.subr.mxu0 0.0
    %62 = vmatpush1.msra.mxu0 0.0
    %63 = vmatprep.subr.mxu0 0.0
    %64 = vmatpush1.msra.mxu0 0.0
    %65 = vmatprep.subr.mxu0 0.0
    %66 = vmatpush1.msra.mxu0 0.0
    %67 = vmatprep.subr.mxu0 0.0
    %68 = vmatpush1.msra.mxu0 0.0
    %69 = vmatprep.subr.mxu0 0.0
    %70 = vmatpush1.msra.mxu0 0.0
    %71 = vmatprep.subr.mxu0 0.0
    %72 = vmatpush1.msra.mxu0 0.0
    %73 = vmatprep.subr.mxu0 0.0
    %74 = vmatpush1.msra.mxu0 0.0
    %75 = vmatprep.subr.mxu0 0.0
    %76 = vmatpush1.msra.mxu0 0.0
    %77 = vmatprep.subr.mxu0 0.0
    %78 = vmatpush1.msra.mxu0 0.0
    %79 = vmatprep.subr.mxu0 0.0
    %80 = vmatpush1.msra.mxu0 0.0
    %81 = vmatprep.subr.mxu0 0.0
    %82 = vmatpush1.msra.mxu0 %v45
    %83 = vmatprep.subr.mxu0 0.0
    %84 = vmatpush1.msra.mxu0 %v44
    %85 = vmatprep.subr.mxu0 0.0
    %86 = vmatpush1.msra.mxu0 %v43
    %87 = vmatprep.subr.mxu0 0.0
    %88 = vmatpush1.msra.mxu0 %v42
    %89 = vmatprep.subr.mxu0 0.0
    %90 = vmatpush2.msra.mxu0 0.0
    %91 = vmatprep.subr.mxu0 0.0
    %92 = vmatpush2.msra.mxu0 0.0
    %93 = vmatprep.subr.mxu0 0.0
    %94 = vmatpush2.msra.mxu0 0.0
    %95 = vmatprep.subr.mxu0 0.0
    %96 = vmatpush2.msra.mxu0 0.0
    %97 = vmatprep.subr.mxu0 0.0
    %98 = vmatpush2.msra.mxu0 0.0
    %99 = vmatprep.subr.mxu0 0.0
    %100 = vmatpush2.msra.mxu0 0.0
    %101 = vmatprep.subr.mxu0 0.0
    %102 = vmatpush2.msra.mxu0 0.0
    %103 = vmatprep.subr.mxu0 0.0
    %104 = vmatpush2.msra.mxu0 0.0
    %105 = vmatprep.subr.mxu0 0.0
    %106 = vmatpush2.msra.mxu0 0.0
    %107 = vmatprep.subr.mxu0 0.0
    %108 = vmatpush2.msra.mxu0 0.0
    %109 = vmatprep.subr.mxu0 0.0
    %110 = vmatpush2.msra.mxu0 0.0
    %111 = vmatprep.subr.mxu0 0.0
    %112 = vmatpush2.msra.mxu0 0.0
    %113 = vmatprep.subr.mxu0 0.0
    %114 = vmatpush2.msra.mxu0 0.0
    %115 = vmatprep.subr.mxu0 0.0
    %116 = vmatpush2.msra.mxu0 0.0
    %117 = vmatprep.subr.mxu0 0.0
    %118 = vmatpush2.msra.mxu0 0.0
    %119 = vmatprep.subr.mxu0 0.0
    %120 = vmatpush2.msra.mxu0 0.0
    %121 = vmatprep.mubr.f32.mxu0 0.0
    %122 = vmatmul.mubr.f32.gmra.mxu0 %v55
    %v123 = vpop.f32.mrf.mxu0
    %v124 = vadd.f32 %v51, %v123
    %v125 = vpop.f32.mrf.mxu0
    %126 = vdwg.mxu0
    %v127 = vtanh.pop %v124
    %s128 = scalar_lea.vmem [#allocation5], 64
    %v129 = vld [vmem:[%s128] sm:$0xff]
    %v130 = vld [vmem:[%s128 + $0x8] sm:$0xff]
    %v131 = vld [vmem:[%s128 + $0x10] sm:$0xff]
    %v132 = vld [vmem:[%s128 + $0x18] sm:$0xff]
    %v133 = vld [vmem:[%s128 + $0x20] sm:$0xff]
    %v134 = vld [vmem:[%s128 + $0x28] sm:$0xff]
    %v135 = vld [vmem:[%s128 + $0x30] sm:$0xff]
    %v136 = vld [vmem:[%s128 + $0x38] sm:$0xff]
    %s137 = scalar_lea.vmem %s2, 1
    %v138 = vld [vmem:[%s137] sm:$0x1]
    %v140 = vlaneseq
    %v141 = vshrl.u32 %v140, 7
    %v142 = vsub.s32 0, %v141
    %v143 = vrot.slane %v138, %v142
    %vm145 = vcmask 523264
    %v147 = vsel %vm145, %v127, 0
    %149 = vmatprep.subr.mxu0 0.0
    %150 = vmatpush1.msra.mxu0 0.0
    %151 = vmatprep.subr.mxu0 0.0
    %152 = vmatpush1.msra.mxu0 0.0
    %153 = vmatprep.subr.mxu0 0.0
    %154 = vmatpush1.msra.mxu0 0.0
    %155 = vmatprep.subr.mxu0 0.0
    %156 = vmatpush1.msra.mxu0 0.0
    %157 = vmatprep.subr.mxu0 0.0
    %158 = vmatpush1.msra.mxu0 0.0
    %159 = vmatprep.subr.mxu0 0.0
    %160 = vmatpush1.msra.mxu0 0.0
    %161 = vmatprep.subr.mxu0 0.0
    %162 = vmatpush1.msra.mxu0 0.0
    %163 = vmatprep.subr.mxu0 0.0
    %164 = vmatpush1.msra.mxu0 0.0
    %165 = vmatprep.subr.mxu0 0.0
    %166 = vmatpush1.msra.mxu0 %v136
    %167 = vmatprep.subr.mxu0 0.0
    %168 = vmatpush1.msra.mxu0 %v135
    %169 = vmatprep.subr.mxu0 0.0
    %170 = vmatpush1.msra.mxu0 %v134
    %171 = vmatprep.subr.mxu0 0.0
    %172 = vmatpush1.msra.mxu0 %v133
    %173 = vmatprep.subr.mxu0 0.0
    %174 = vmatpush1.msra.mxu0 %v132
    %175 = vmatprep.subr.mxu0 0.0
    %176 = vmatpush1.msra.mxu0 %v131
    %177 = vmatprep.subr.mxu0 0.0
    %178 = vmatpush1.msra.mxu0 %v130
    %179 = vmatprep.subr.mxu0 0.0
    %180 = vmatpush1.msra.mxu0 %v129
    %181 = vmatprep.subr.mxu0 0.0
    %182 = vmatpush2.msra.mxu0 0.0
    %183 = vmatprep.subr.mxu0 0.0
    %184 = vmatpush2.msra.mxu0 0.0
    %185 = vmatprep.subr.mxu0 0.0
    %186 = vmatpush2.msra.mxu0 0.0
    %187 = vmatprep.subr.mxu0 0.0
    %188 = vmatpush2.msra.mxu0 0.0
    %189 = vmatprep.subr.mxu0 0.0
    %190 = vmatpush2.msra.mxu0 0.0
    %191 = vmatprep.subr.mxu0 0.0
    %192 = vmatpush2.msra.mxu0 0.0
    %193 = vmatprep.subr.mxu0 0.0
    %194 = vmatpush2.msra.mxu0 0.0
    %195 = vmatprep.subr.mxu0 0.0
    %196 = vmatpush2.msra.mxu0 0.0
    %197 = vmatprep.subr.mxu0 0.0
    %198 = vmatpush2.msra.mxu0 0.0
    %199 = vmatprep.subr.mxu0 0.0
    %200 = vmatpush2.msra.mxu0 0.0
    %201 = vmatprep.subr.mxu0 0.0
    %202 = vmatpush2.msra.mxu0 0.0
    %203 = vmatprep.subr.mxu0 0.0
    %204 = vmatpush2.msra.mxu0 0.0
    %205 = vmatprep.subr.mxu0 0.0
    %206 = vmatpush2.msra.mxu0 0.0
    %207 = vmatprep.subr.mxu0 0.0
    %208 = vmatpush2.msra.mxu0 0.0
    %209 = vmatprep.subr.mxu0 0.0
    %210 = vmatpush2.msra.mxu0 0.0
    %211 = vmatprep.subr.mxu0 0.0
    %212 = vmatpush2.msra.mxu0 0.0
    %213 = vmatprep.mubr.f32.mxu0 0.0
    %214 = vmatmul.mubr.f32.gmra.mxu0 %v147
    %v215 = vpop.f32.mrf.mxu0
    %v216 = vadd.f32 %v143, %v215
    %v217 = vpop.f32.mrf.mxu0
    %218 = vdwg.mxu0
    %v219 = vtanh.pop %v216
    %vm220 = vcmask 130048
    %221 = vst.msk [vmem:[#allocation7] sm:$0xff] %vm220, %v219
    // Predicated region
    $region22: #{net_forward.1} parent=1 // pred_check
      _
    $region23: #{net_forward.1} parent=1 // pred_check_branch
      %223 = sbr.rel (0) target = $region25
    $region24: #{net_forward.1} parent=1 // pred_region
      %s225 = ssub.s32 128, 128
      %226 = vsyncadd [#allocation4], %s225
      %s228 = sshll.u32 [#allocation7], 4
      %s229 = int_to_ptr.vmem [resolvable:$true] %s228
      %231 = dma.vmem_to_hbm [thread:$0]  %s229, 128, %s3, [#allocation4]
    $region25: #{net_forward.1} parent=1 // pred_fallthru
      _
    // Predicated region
    $region26: #{net_forward.1} parent=1 // pred_check
      _
    $region27: #{net_forward.1} parent=1 // pred_check_branch
      %233 = sbr.rel (0) target = $region29
    $region28: #{net_forward.1} parent=1 // pred_region
      %234 = dma.done [#allocation4], 128
    $region29: #{net_forward.1} parent=1 // pred_fallthru
      _
    %235 = vsyncpa [#allocation3], 1
    %236 = vsyncpa [#allocation6], 1
    %237 = vsyncpa [#allocation4], 1

</llo_original>
